<compile_context>
chip_gen: v6e
topology: v6e:2x2x1
jax: 0.10.0
libtpu: 0.0.40
codegen_flags: <defaults>
</compile_context>

<pallas_src>
import jax
import jax.numpy as jnp
from jax.experimental import pallas as pl
from jax.experimental.pallas import tpu as pltpu


def _round_up(n, m):
    return ((n + m - 1) // m) * m


def _sublane_pack(dtype):
    """Second-minor packing: 8 for 32-bit, 16 for bf16/fp16, 32 for int8/fp8."""
    return max(8, 32 // jnp.dtype(dtype).itemsize)


_TILE_BYTES = 2 * 1024 * 1024   # ~2 MiB/tile; in+out double-buffered ~8 MiB VMEM
_MIN_STEPS = 4                  # enough grid steps for pipeline steady state


def _pick_tiles(B, L, dtype):
    """Choose (Bb, Lc, Lp): row block, 128-aligned column chunk, padded width."""
    itemsize = jnp.dtype(dtype).itemsize
    pack = _sublane_pack(dtype)
    Lp = _round_up(max(L, 1), 128)

    if B <= pack:
        Bb = B                                       # block dim == full array dim
    else:
        # Rows whose full (padded) width fits the per-tile byte budget.
        rows_budget = (_TILE_BYTES // (Lp * itemsize) // pack) * pack
        if rows_budget >= pack:
            # Narrow rows: whole rows per block; target >= _MIN_STEPS row blocks.
            Bb = max(pack, min(rows_budget, _round_up(pl.cdiv(B, _MIN_STEPS), pack)))
        else:
            # Wide rows: minimal row block; tile along columns instead.
            Bb = pack
        # Prefer a row block that divides B (even v7x megacore split, no ragged
        # boundary block).
        if B % Bb != 0:
            for cand in range(Bb, pack - 1, -pack):
                if B % cand == 0:
                    Bb = cand
                    break

    # Column chunk: multiple of 128 with Bb*Lc*itemsize <= budget.
    lanes_budget = max(128, (_TILE_BYTES // (Bb * itemsize)) // 128 * 128)
    Lc = min(Lp, lanes_budget)

    # If the grid is too short for the pipeline to reach steady state, split
    # columns further (per-step overhead is only ~0.35 us).
    nb = pl.cdiv(B, Bb)
    nc = pl.cdiv(Lp, Lc)
    if nb * nc < _MIN_STEPS and Lp > 128:
        target_nc = min(pl.cdiv(_MIN_STEPS, nb), Lp // 128)
        if target_nc > nc:
            Lc = _round_up(pl.cdiv(Lp, target_nc), 128)
    return Bb, Lc, Lp


def _squeeze_kernel(last_chunk_ref, lim_ref, x_ref, o_ref):
    # last_chunk_ref: SMEM int32 (nb,)  scalar-prefetch; consumed only by the x
    #                 index_map (read-skip of fully-padded column chunks).
    # lim_ref       : VMEM int32 (Bb, 1)  per-row valid element count x_len[b]*D
    # x_ref         : VMEM (Bb, Lc)       column chunk of the flattened (B, T*D) slab
    # o_ref         : VMEM (Bb, Lc)       lane-dense output chunk (Lc % 128 == 0)
    del last_chunk_ref
    col0 = pl.program_id(1) * o_ref.shape[1]
    col = col0 + jax.lax.broadcasted_iota(jnp.int32, o_ref.shape, 1)
    # NOTE: the mask must stay even for "fully valid" tiles — the last column
    # chunk / last row block may overhang the array bounds (Lp > L, nb*Bb > B),
    # and for skipped chunks x_ref holds a re-pointed (stale) block; the mask
    # (col >= lim there) is exactly what keeps the semantics correct.
    mask = col < lim_ref[...]                        # (Bb,1) broadcasts over (Bb,Lc)
    o_ref[...] = jnp.where(mask, x_ref[...], 0).astype(o_ref.dtype)


def squeeze_embedding(x, x_len, max_len=None, *, min_pallas_bytes=256 * 1024):
    """x: (B, T, D); x_len: (B,) int lengths.

    Returns (B, max_len, D) with positions t >= x_len[b] zeroed, matching the
    pack_padded_sequence -> pad_packed_sequence round-trip of the PyTorch
    module (the sort/unsort in the module cancel out).

    max_len: pass explicitly in hot paths to avoid the device->host sync (JAX
      needs a static output width).  Must satisfy max_len >= max(x_len); a
      smaller value truncates long rows instead of matching PyTorch's width.
    min_pallas_bytes: below this total size the plain XLA fusion is used
      (fixed pallas_call / DMA-setup overhead dominates for tiny inputs).
    """
    x = jnp.asarray(x)
    x_len = jnp.asarray(x_len).astype(jnp.int32)
    B, T, D = x.shape
    if max_len is None:
        max_len = int(jax.device_get(jnp.max(x_len)))  # one sync; pass it in hot paths
    max_len = int(max_len)
    # TODO(synk): no cheap in-graph assert that max_len >= max(x_len); if it is
    # smaller, rows longer than max_len are truncated (diverges from PyTorch).

    L = max_len * D                                    # valid columns, flattened
    itemsize = jnp.dtype(x.dtype).itemsize

    if B * L * itemsize < min_pallas_bytes:
        # Tiny input fast path: XLA fusion beats kernel-launch overhead.
        t_idx = jnp.arange(max_len, dtype=jnp.int32)[None, :, None]
        return jnp.where(t_idx < x_len[:, None, None], x[:, :max_len, :], 0).astype(x.dtype)

    Bb, Lc, Lp = _pick_tiles(B, L, x.dtype)
    nb = pl.cdiv(B, Bb)
    nc = pl.cdiv(Lp, Lc)

    # Free reshape (row-major merge of trailing dims -> no copy).
    x_flat = x.reshape(B, T * D)
    lim = (x_len * jnp.int32(D)).reshape(B, 1)         # valid elements per row

    # Per row block: index of the last column chunk containing any valid data.
    # Chunks beyond it are entirely padding; the x index_map re-points them at
    # the already-resident block so their HBM reads are elided by the pipeline.
    lim_blk = jnp.pad(x_len * jnp.int32(D), (0, nb * Bb - B)).reshape(nb, Bb)
    blk_max = jnp.max(lim_blk, axis=1)                 # (nb,)
    last_chunk = jnp.clip((blk_max + (Lc - 1)) // Lc - 1, 0, nc - 1).astype(jnp.int32)

    out_flat = pl.pallas_call(
        _squeeze_kernel,
        out_shape=jax.ShapeDtypeStruct((B, L), x.dtype),
        grid_spec=pltpu.PrefetchScalarGridSpec(
            num_scalar_prefetch=1,
            grid=(nb, nc),
            in_specs=[
                # Per-row limits: block index changes only with the row block,
                # so this tiny block is fetched nb times total.
                pl.BlockSpec((Bb, 1), lambda i, j, lastc: (i, 0)),
                # Data chunk: fully-padded chunks (j > last_chunk[i]) re-point
                # at the previously fetched chunk -> read DMA skipped.
                pl.BlockSpec((Bb, Lc),
                             lambda i, j, lastc: (i, jnp.minimum(j, lastc[i]))),
            ],
            out_specs=pl.BlockSpec((Bb, Lc), lambda i, j, lastc: (i, j)),
        ),
        compiler_params=pltpu.CompilerParams(
            dimension_semantics=("parallel", "arbitrary"),
            vmem_limit_bytes=32 * 1024 * 1024,
        ),
        cost_estimate=pl.CostEstimate(
            flops=0, transcendentals=0,
            bytes_accessed=2 * B * L * itemsize + B * 4),
    )(last_chunk, lim, x_flat)

    return out_flat.reshape(B, max_len, D)


def _reference(x, x_len, max_len=None):
    """Pure-JAX reference of the PyTorch forward."""
    x = jnp.asarray(x)
    x_len = jnp.asarray(x_len).astype(jnp.int32)
    if max_len is None:
        max_len = int(jax.device_get(jnp.max(x_len)))
    t_idx = jnp.arange(max_len)[None, :, None]
    mask = t_idx < x_len[:, None, None]
    return jnp.where(mask, x[:, :max_len, :], 0).astype(x.dtype)


if __name__ == "__main__":
    key = jax.random.PRNGKey(0)
    k1, k2, k3, k4, k5 = jax.random.split(key, 5)

    # Case 1: typical small batch-first usage (force the Pallas path).
    B, T, D = 2, 8, 32
    x = jax.random.normal(k1, (B, T, D), dtype=jnp.float32)
    x_len = jnp.array([5, 8], dtype=jnp.int32)
    out = jax.block_until_ready(squeeze_embedding(x, x_len, min_pallas_bytes=0))
    ref = _reference(x, x_len)
    assert out.shape == ref.shape and out.dtype == ref.dtype, (out.shape, ref.shape)
    assert jnp.array_equal(out, ref), "case 1 mismatch vs reference"

    # Same inputs through the small-input XLA fast path (default threshold).
    out_fast = jax.block_until_ready(squeeze_embedding(x, x_len))
    assert jnp.array_equal(out_fast, ref), "fast-path mismatch vs reference"

    # Case 2: multi-block grid, ragged lengths, column chunking + read skipping.
    B2, T2, D2 = 12, 16, 48
    x2 = jax.random.normal(k2, (B2, T2, D2), dtype=jnp.float32)
    x_len2 = jax.random.randint(k3, (B2,), 1, T2 + 1, dtype=jnp.int32)
    out2 = jax.block_until_ready(squeeze_embedding(x2, x_len2, min_pallas_bytes=0))
    ref2 = _reference(x2, x_len2)
    assert out2.shape == ref2.shape, (out2.shape, ref2.shape)
    assert jnp.array_equal(out2, ref2), "case 2 mismatch vs reference"

    # Case 3: bf16 embeddings (dtype-aware sublane rounding path).
    B3, T3, D3 = 16, 12, 64
    x3 = jax.random.normal(k4, (B3, T3, D3), dtype=jnp.float32).astype(jnp.bfloat16)
    x_len3 = jax.random.randint(k5, (B3,), 1, T3 + 1, dtype=jnp.int32)
    out3 = jax.block_until_ready(squeeze_embedding(x3, x_len3, min_pallas_bytes=0))
    ref3 = _reference(x3, x_len3)
    assert out3.shape == ref3.shape and out3.dtype == jnp.bfloat16
    assert jnp.array_equal(out3, ref3), "case 3 mismatch vs reference"

    print("KERNEL_OK")
</pallas_src>

<mosaic_0001>
module attributes {stable_mosaic.version = 11 : i64} {
  func.func @_squeeze_kernel(%arg0: i32, %arg1: i32, %arg2: memref<1xi32, #tpu.memory_space<smem>>, %arg3: memref<2x1xi32, #tpu.memory_space<vmem>>, %arg4: memref<2x128xf32, #tpu.memory_space<vmem>>, %arg5: memref<2x128xf32, #tpu.memory_space<vmem>>) attributes {dimension_semantics = [#tpu.dimension_semantics<parallel>, #tpu.dimension_semantics<arbitrary>], iteration_bounds = array<i64: 1, 2>, scalar_prefetch = 1 : i64, scratch_operands = 0 : i64, tpu.core_type = #tpu.core_type<tc>, window_params = [{transform_indices = @transform_0, window_bounds = array<i64: 2, 1>}, {transform_indices = @transform_1, window_bounds = array<i64: 2, 128>}, {transform_indices = @transform_2, window_bounds = array<i64: 2, 128>}]} {
    %c128_i32 = arith.constant 128 : i32
    %0 = arith.muli %arg1, %c128_i32 : i32
    %1 = tpu.iota {dimensions = array<i32: 1>} : vector<2x128xi32>
    %2 = vector.broadcast %0 : i32 to vector<2x128xi32>
    %3 = arith.addi %2, %1 : vector<2x128xi32>
    %c0 = arith.constant 0 : index
    %c0_0 = arith.constant 0 : index
    %4 = vector.load %arg3[%c0, %c0_0] : memref<2x1xi32, #tpu.memory_space<vmem>>, vector<2x1xi32>
    %5 = vector.broadcast %4 : vector<2x1xi32> to vector<2x128xi32>
    %6 = arith.cmpi slt, %3, %5 : vector<2x128xi32>
    %c0_1 = arith.constant 0 : index
    %c0_2 = arith.constant 0 : index
    %7 = vector.load %arg4[%c0_1, %c0_2] : memref<2x128xf32, #tpu.memory_space<vmem>>, vector<2x128xf32>
    %c0_i32 = arith.constant 0 : i32
    %8 = arith.sitofp %c0_i32 : i32 to f32
    %9 = vector.broadcast %8 : f32 to vector<2x128xf32>
    %10 = arith.select %6, %7, %9 : vector<2x128xi1>, vector<2x128xf32>
    %c0_3 = arith.constant 0 : index
    %c0_4 = arith.constant 0 : index
    %11 = vector.load %arg5[%c0_3, %c0_4] : memref<2x128xf32, #tpu.memory_space<vmem>>, vector<2x128xf32>
    tpu.vector_store %arg5[%c0_3, %c0_4], %10 {strides = array<i32>} : memref<2x128xf32, #tpu.memory_space<vmem>>, vector<2x128xf32>,
    return
  }
  func.func @transform_0(%arg0: i32, %arg1: i32, %arg2: memref<1xi32, #tpu.memory_space<smem>>) -> (i32, i32) {
    %c0_i32 = arith.constant 0 : i32
    %c0_i32_0 = arith.constant 0 : i32
    return %arg0, %c0_i32 : i32, i32
  }
  func.func @transform_1(%arg0: i32, %arg1: i32, %arg2: memref<1xi32, #tpu.memory_space<smem>>) -> (i32, i32) {
    %0 = arith.index_cast %arg0 : i32 to index
    %1 = memref.load %arg2[%0] : memref<1xi32, #tpu.memory_space<smem>>
    %2 = arith.minsi %arg1, %1 : i32
    %c0_i32 = arith.constant 0 : i32
    return %arg0, %2 : i32, i32
  }
  func.func @transform_2(%arg0: i32, %arg1: i32, %arg2: memref<1xi32, #tpu.memory_space<smem>>) -> (i32, i32) {
    %c0_i32 = arith.constant 0 : i32
    return %arg0, %arg1 : i32, i32
  }
}

</mosaic_0001>

<llo_original>
// kernel: tpu_custom_call.1
$region0: #{tpu_custom_call.1}
  #allocation0 [shape = 'u32[]', space=smem, size = 0x4, offset = 0x4, fixed_abs, tag = 'smem constant byte address 0x4 - core index']
  #allocation1 [shape = 'u32[144,128]{1,0:T(1,128)}', space=vmem, size = 0x12000, scoped, tag = 'internal scratch']
  #allocation2 [shape = 's32[1]{0}', space=sflag, size = 0x4, scoped, tag = 'scoped memory for tpu_custom_call.1']
  #allocation3 [shape = 's32[1]{0:T(128)S(6)}', space=smem, size = 0x200, scoped, tag = 'prefetched SMEM operand 0']
  %s0 = inlined_call_operand.<no memory space> [shape: s32[1], index: 0, kind: input, shape index: {}]
  %s1 = inlined_call_operand.vmem [shape: s32[2,1], index: 1, kind: input, shape index: {}]
  %s2 = inlined_call_operand.vmem [shape: f32[2,256], index: 2, kind: input, shape index: {}]
  %s3 = inlined_call_operand.hbm [shape: f32[2,256], index: 3, kind: output, shape index: {}]
  %s4 = sld [smem:[#allocation0]]
  $region41: #{tpu_custom_call.1} parent=0
    _
  %s6 = ssub.s32 1, %s4
  %s7 = scalar_select 0, %s6, %s4
  %8 = sst [smem:[#allocation3]] %s0
  $region1: #{tpu_custom_call.1} parent=0
    #allocation4 [shape = 'u8[2048]{0}', space=vmem, size = 0x800, scoped, tag = 'output window, operand 0']
    #allocation5 [shape = 's32[2]{0}', space=sflag, size = 0x8, scoped, tag = 'scoped memory for tpu_custom_call.1']
    %9 = vsyncpa [#allocation5], 0
    %s10 = scalar_lea.sflag [#allocation5], 1
    %11 = vsyncpa %s10, 0
    loop: start=0, step=1, limit=4
    $region2: #{tpu_custom_call.1} parent=1 // loop_pre_header
      _
    $region3: #{tpu_custom_call.1} parent=1 // loop_header
      %s13 = sphi 0, %s17
      %p14 = scmp.ge.s32.totalorder %s13, 4
      %s20 = sphi 0, %s32
      %s21 = sphi 0, %s28
      %s22 = sphi 0, %s20
      %s23 = sphi 0, %s21
      %s24 = sphi 0, %s22
      %s25 = sphi 0, %s23
      %s35 = sphi 0, %s37
      %s38 = sphi 0, %s35
      %s39 = sphi 0, %s38
      %s55 = sphi 0, %s39
      %s69 = sphi 0, %s71
      %s72 = sphi 0, %s69
      %s73 = sphi 0, %s72
      %s89 = sphi 0, %s73
      %s97 = sphi 0, %s99
      %s100 = sphi 0, %s97
      %s101 = sphi 0, %s100
      %s117 = sphi 0, %s101
    $region4: #{tpu_custom_call.1} parent=1 // loop_header_branch
      %16 = sbr.rel (%p14) target = $region8
    $region5: #{tpu_custom_call.1} parent=1 // loop_body
      %s18 = ssub.s32 %s13, 1
      %s19 = ssub.s32 %s13, 2
      %s26 = sadd.s32 1, %s21
      %p27 = scmp.ge.s32.totalorder %s26, 2
      %s28 = scalar_select %p27, 0, %s26
      %s29 = sadd.s32 1, %s20
      %s30 = scalar_select %p27, %s29, %s20
      %p31 = scmp.ge.s32.totalorder %s30, 1
      %s32 = scalar_select %p31, 0, %s30
      %s33 = ssub.s32 %s20, %s32
      %p34 = scmp.eq.s32.totalorder %s33, 0
      %s36 = sadd.s32 %s35, 1
      %s37 = scalar_select %p34, %s35, %s36
      %p40 = pneg %p34
      %p41 = scmp.eq.s32.totalorder %s13, 1
      %p42 = por %p40, %p41
      %p43 = scmp.ne.s32.totalorder %s35, %s38
      %p44 = scmp.eq.s32.totalorder %s13, 0
      %p45 = por %p43, %p44
      %p46 = scmp.ne.s32.totalorder %s35, %s38
      %p47 = scmp.eq.s32.totalorder %s18, 1
      %p48 = por %p46, %p47
      %p49 = scmp.ne.s32.totalorder %s38, %s39
      %p50 = scmp.eq.s32.totalorder %s18, 0
      %p51 = por %p49, %p50
      %p52 = scmp.ne.s32.totalorder %s38, %s39
      %p53 = scmp.eq.s32.totalorder %s19, 1
      %p54 = por %p52, %p53
      %p56 = scmp.ne.s32.totalorder %s39, %s55
      %p57 = scmp.eq.s32.totalorder %s19, 0
      %p58 = por %p56, %p57
      %s59 = sld [smem:[#allocation3 + %s20]]
      %p60 = scmp.lt.s32.totalorder %s21, %s59
      %s61 = scalar_select %p60, %s21, %s59
      %s62 = sld [smem:[#allocation3 + %s32]]
      %p63 = scmp.lt.s32.totalorder %s28, %s62
      %s64 = scalar_select %p63, %s28, %s62
      %s65 = ssub.s32 %s20, %s32
      %s66 = ssub.s32 %s61, %s64
      %s67 = sor.u32 %s65, %s66
      %p68 = scmp.eq.s32.totalorder %s67, 0
      %s70 = sadd.s32 %s69, 1
      %s71 = scalar_select %p68, %s69, %s70
      %p74 = pneg %p68
      %p75 = scmp.eq.s32.totalorder %s13, 1
      %p76 = por %p74, %p75
      %p77 = scmp.ne.s32.totalorder %s69, %s72
      %p78 = scmp.eq.s32.totalorder %s13, 0
      %p79 = por %p77, %p78
      %p80 = scmp.ne.s32.totalorder %s69, %s72
      %p81 = scmp.eq.s32.totalorder %s18, 1
      %p82 = por %p80, %p81
      %p83 = scmp.ne.s32.totalorder %s72, %s73
      %p84 = scmp.eq.s32.totalorder %s18, 0
      %p85 = por %p83, %p84
      %p86 = scmp.ne.s32.totalorder %s72, %s73
      %p87 = scmp.eq.s32.totalorder %s19, 1
      %p88 = por %p86, %p87
      %p90 = scmp.ne.s32.totalorder %s73, %s89
      %p91 = scmp.eq.s32.totalorder %s19, 0
      %p92 = por %p90, %p91
      %s93 = ssub.s32 %s20, %s32
      %s94 = ssub.s32 %s21, %s28
      %s95 = sor.u32 %s93, %s94
      %p96 = scmp.eq.s32.totalorder %s95, 0
      %s98 = sadd.s32 %s97, 1
      %s99 = scalar_select %p96, %s97, %s98
      %p102 = pneg %p96
      %p103 = scmp.eq.s32.totalorder %s13, 1
      %p104 = por %p102, %p103
      %p105 = scmp.ne.s32.totalorder %s97, %s100
      %p106 = scmp.eq.s32.totalorder %s13, 0
      %p107 = por %p105, %p106
      %p108 = scmp.ne.s32.totalorder %s97, %s100
      %p109 = scmp.eq.s32.totalorder %s18, 1
      %p110 = por %p108, %p109
      %p111 = scmp.ne.s32.totalorder %s100, %s101
      %p112 = scmp.eq.s32.totalorder %s18, 0
      %p113 = por %p111, %p112
      %p114 = scmp.ne.s32.totalorder %s100, %s101
      %p115 = scmp.eq.s32.totalorder %s19, 1
      %p116 = por %p114, %p115
      %p118 = scmp.ne.s32.totalorder %s101, %s117
      %p119 = scmp.eq.s32.totalorder %s19, 0
      %p120 = por %p118, %p119
      %p121 = scmp.le.s32.totalorder 1, %s13
      %p122 = scmp.lt.s32.totalorder %s13, 3
      %p123 = pnand %p121, %p122
      %p124 = pneg %p123
      // Predicated region
      $region9: #{tpu_custom_call.1} parent=5 // pred_check
        _
      $region10: #{tpu_custom_call.1} parent=5 // pred_check_branch
        %126 = sbr.rel (%p123) target = $region12
      $region11: #{tpu_custom_call.1} parent=5 // pred_region
        %s127 = ssub.s32 %s13, 1
        // Predicated region
        $region13: #{tpu_custom_call.1} parent=11 // pred_check
          %p128 = pneg %p51
        $region14: #{tpu_custom_call.1} parent=11 // pred_check_branch
          %130 = sbr.rel (%p128) target = $region16
        $region15: #{tpu_custom_call.1} parent=11 // pred_region
          %p131 = scmp.lt.s32.totalorder %s22, 0
          %s132 = scalar_select %p131, %s22, 0
          %s133 = smul.addr %s132, 2
          %s134 = scalar_lea.vmem %s1, %s133
        $region16: #{tpu_custom_call.1} parent=11 // pred_fallthru
          _
      $region12: #{tpu_custom_call.1} parent=5 // pred_fallthru
        _
      %p135 = scmp.lt.s32.totalorder %s13, 2
      // Predicated region
      $region17: #{tpu_custom_call.1} parent=5 // pred_check
        %p136 = pneg %p135
      $region18: #{tpu_custom_call.1} parent=5 // pred_check_branch
        %138 = sbr.rel (%p136) target = $region20
      $region19: #{tpu_custom_call.1} parent=5 // pred_region
        // Predicated region
        $region21: #{tpu_custom_call.1} parent=19 // pred_check
          %p139 = pneg %p79
        $region22: #{tpu_custom_call.1} parent=19 // pred_check_branch
          %141 = sbr.rel (%p139) target = $region24
        $region23: #{tpu_custom_call.1} parent=19 // pred_region
          %s142 = sld [smem:[#allocation3 + %s20]]
          %p143 = scmp.lt.s32.totalorder %s21, %s142
          %s144 = scalar_select %p143, %s21, %s142
          %p145 = scmp.lt.s32.totalorder %s20, 0
          %s146 = scalar_select %p145, %s20, 0
          %p147 = scmp.lt.s32.totalorder %s144, 1
          %s148 = scalar_select %p147, %s144, 1
          %s149 = smul.addr %s146, 2
          %s150 = sadd.s32 %s148, %s149
          %s151 = smul.addr %s150, 2
          %s152 = scalar_lea.vmem %s2, %s151
          %s153 = sld [smem:[#allocation3 + %s20]]
          %p154 = scmp.lt.s32.totalorder %s21, %s153
          %s155 = scalar_select %p154, %s21, %s153
        $region24: #{tpu_custom_call.1} parent=19 // pred_fallthru
          _
      $region20: #{tpu_custom_call.1} parent=5 // pred_fallthru
        _
      %p156 = scmp.le.s32.totalorder 1, %s13
      %p157 = scmp.lt.s32.totalorder %s13, 3
      %p158 = pnand %p156, %p157
      %p159 = pneg %p158
      // Predicated region
      $region25: #{tpu_custom_call.1} parent=5 // pred_check
        _
      $region26: #{tpu_custom_call.1} parent=5 // pred_check_branch
        %161 = sbr.rel (%p158) target = $region28
      $region27: #{tpu_custom_call.1} parent=5 // pred_region
        %s162 = ssub.s32 %s13, 1
        %p163 = scmp.lt.s32.totalorder %s22, 0
        %s164 = scalar_select %p163, %s22, 0
        %s165 = smul.addr %s164, 2
        %s166 = scalar_lea.vmem %s1, %s165
        %p167 = pneg %p51
        %p168 = pneg %p48
        %s169 = sld [smem:[#allocation3 + %s22]]
        %p170 = scmp.lt.s32.totalorder %s23, %s169
        %s171 = scalar_select %p170, %s23, %s169
        %p172 = scmp.lt.s32.totalorder %s22, 0
        %s173 = scalar_select %p172, %s22, 0
        %p174 = scmp.lt.s32.totalorder %s171, 1
        %s175 = scalar_select %p174, %s171, 1
        %s176 = smul.addr %s173, 2
        %s177 = sadd.s32 %s175, %s176
        %s178 = smul.addr %s177, 2
        %s179 = scalar_lea.vmem %s2, %s178
        %p180 = pneg %p85
        %p181 = pneg %p82
        %p182 = pneg %p113
        %p183 = pneg %p110
        %s184 = sand.u32 %s100, 1
        %s185 = scalar_lea.sflag [#allocation5], %s184
        %s186 = sand.u32 %s100, 1
        %s187 = smul.addr %s186, 2
        %s188 = scalar_lea.vmem [#allocation4], %s187
        %p189 = scmp.lt.s32.totalorder %s22, 0
        %s190 = scalar_select %p189, %s22, 0
        %s191 = smul.addr %s190, 2
        %s192 = scalar_lea.vmem %s1, %s191
        %s193 = sld [smem:[#allocation3 + %s22]]
        %p194 = scmp.lt.s32.totalorder %s23, %s193
        %s195 = scalar_select %p194, %s23, %s193
        %p196 = scmp.lt.s32.totalorder %s22, 0
        %s197 = scalar_select %p196, %s22, 0
        %p198 = scmp.lt.s32.totalorder %s195, 1
        %s199 = scalar_select %p198, %s195, 1
        %s200 = smul.addr %s197, 2
        %s201 = sadd.s32 %s199, %s200
        %s202 = smul.addr %s201, 2
        %s203 = scalar_lea.vmem %s2, %s202
        %s204 = sld [smem:[#allocation3 + %s22]]
        %p205 = scmp.lt.s32.totalorder %s23, %s204
        %s206 = scalar_select %p205, %s23, %s204
        %s207 = smul.u32 %s23, 128
        %v208 = vlaneseq
        %v209 = vand.u32 %v208, 127
        %v210 = vstv %s207
        %v211 = vadd.s32 %v210, %v209
        %v212 = vld [vmem:[%s192] sm:$0x3]
        %213 = vset.pattern.permute.xlu0 0
        %214 = vperm.xlu0 %213, %v212
        %v215 = vpop.permute.xlu0 %214
        %vm216 = vcmp.lt.s32.totalorder %v211, %v215
        %v217 = vld [vmem:[%s203] sm:$0x3]
        %v218 = vsel %vm216, %v217, 0.0
        %219 = vst [vmem:[%s188] sm:$0x3] %v218
        %s220 = sand.u32 %s100, 1
        %s221 = scalar_lea.sflag [#allocation5], %s220
        %s222 = sand.u32 %s100, 1
        %s223 = smul.addr %s222, 2
        %s224 = scalar_lea.vmem [#allocation4], %s223
        // Predicated region
        $region29: #{tpu_custom_call.1} parent=27 // pred_check
          %p225 = pneg %p110
        $region30: #{tpu_custom_call.1} parent=27 // pred_check_branch
          %227 = sbr.rel (%p225) target = $region32
        $region31: #{tpu_custom_call.1} parent=27 // pred_region
          %s229 = ssub.s32 32, 32
          %230 = vsyncadd %s221, %s229
          %s231 = smul.addr %s22, 2
          %s232 = sadd.s32 %s23, %s231
          %s233 = smul.addr %s232, 32
          %s234 = scalar_lea.hbm %s3, %s233
          %s236 = sshll.u32 %s224, 4
          %s237 = int_to_ptr.vmem [resolvable:$true] %s236
          %239 = dma.vmem_to_hbm [thread:$0]  %s237, 32, %s234, %s221
        $region32: #{tpu_custom_call.1} parent=27 // pred_fallthru
          _
      $region28: #{tpu_custom_call.1} parent=5 // pred_fallthru
        _
      %p240 = scmp.le.s32.totalorder 2, %s13
      // Predicated region
      $region33: #{tpu_custom_call.1} parent=5 // pred_check
        %p241 = pneg %p240
      $region34: #{tpu_custom_call.1} parent=5 // pred_check_branch
        %243 = sbr.rel (%p241) target = $region36
      $region35: #{tpu_custom_call.1} parent=5 // pred_region
        %s244 = ssub.s32 %s13, 2
        // Predicated region
        $region37: #{tpu_custom_call.1} parent=35 // pred_check
          %p245 = pneg %p116
        $region38: #{tpu_custom_call.1} parent=35 // pred_check_branch
          %247 = sbr.rel (%p245) target = $region40
        $region39: #{tpu_custom_call.1} parent=35 // pred_region
          %s248 = sand.u32 %s101, 1
          %s249 = scalar_lea.sflag [#allocation5], %s248
          %s250 = sand.u32 %s101, 1
          %s251 = smul.addr %s250, 2
          %s252 = scalar_lea.vmem [#allocation4], %s251
          %253 = dma.done %s249, 32
        $region40: #{tpu_custom_call.1} parent=35 // pred_fallthru
          _
      $region36: #{tpu_custom_call.1} parent=5 // pred_fallthru
        _
    $region6: #{tpu_custom_call.1} parent=1 // loop_footer
      %s17 = sadd.s32 1, %s13
    $region7: #{tpu_custom_call.1} parent=1 // loop_footer_branch
      %12 = sbr.rel target = $region3
    $region8: #{tpu_custom_call.1} parent=1 // loop_exit
      _
    %254 = vsyncpa [#allocation5], 1
    %s255 = scalar_lea.sflag [#allocation5], 1
    %256 = vsyncpa %s255, 1

</llo_original>
